<compile_context>
chip_gen: v7x
topology: tpu7x:2x2x1
jax: 0.10.0
libtpu: 0.0.40
codegen_flags: <defaults>
</compile_context>

<pallas_src>
import functools

import jax
import jax.numpy as jnp
from jax import lax
from jax.experimental import pallas as pl
from jax.experimental.pallas import tpu as pltpu


def _adapter_kernel(x_ref, w1_ref, w2_ref, o_ref, *, compute_dtype):
    # x_ref:  (bm, c_in)       tile of input rows, native dtype (cast in-kernel)
    # w1_ref: (c_in, hidden)   first Linear weight, pre-transposed, resident in VMEM
    # w2_ref: (hidden, c_in)   second Linear weight, pre-transposed, resident in VMEM
    # o_ref:  (bm, c_in)
    x = x_ref[...]
    if compute_dtype is not None and x.dtype != compute_dtype:
        x = x.astype(compute_dtype)  # VPU cast, hidden under the input DMA

    # h = relu(x @ W1^T) ; weights are pre-transposed, so plain (1,)x(0,) contraction.
    h = lax.dot_general(
        x, w1_ref[...],
        dimension_numbers=(((1,), (0,)), ((), ())),
        preferred_element_type=jnp.float32,
    )
    h = jnp.maximum(h, 0.0)  # ReLU in f32 (v5e VPU has no bf16 path)

    # y = relu(h @ W2^T)
    y = lax.dot_general(
        h.astype(w2_ref.dtype), w2_ref[...],
        dimension_numbers=(((1,), (0,)), ((), ())),
        preferred_element_type=jnp.float32,
    )
    y = jnp.maximum(y, 0.0)  # ReLU

    o_ref[...] = y.astype(o_ref.dtype)


def _round_up(a, b):
    return ((a + b - 1) // b) * b


def _vmem_estimate_bytes(bm, c_in, hidden, x_itemsize, out_itemsize, w_itemsize):
    """Rough VMEM footprint: double-buffered I/O + resident weights + body-locals."""
    lane = 128
    h_lanes = _round_up(max(hidden, 1), lane)          # hidden dim is lane-padded
    io = 2 * bm * c_in * x_itemsize + 2 * bm * c_in * out_itemsize
    w = 2 * c_in * hidden * w_itemsize
    body = bm * h_lanes * 4 + bm * h_lanes * w_itemsize + bm * c_in * 4  # h_f32, h_cast, y_f32
    return io + w + body


def adapter_forward(x, w1, w2, *, block_m=4096, compute_dtype=jnp.bfloat16,
                    out_dtype=None):
    """Adapter forward.

    x:  (M, c_in)
    w1: (hidden, c_in)   -- PyTorch nn.Linear(c_in, hidden).weight layout
    w2: (c_in, hidden)   -- PyTorch nn.Linear(hidden, c_in).weight layout
    out_dtype: output dtype; defaults to x.dtype (set jnp.bfloat16 downstream if
               acceptable to halve the output HBM writeback).
    """
    M, c_in = x.shape
    hidden = w1.shape[0]
    assert w1.shape == (hidden, c_in)
    assert w2.shape == (c_in, hidden)

    if out_dtype is None:
        out_dtype = x.dtype

    # Cast only the (tiny) weights at the boundary; x stays in its native dtype so
    # the kernel DMAs original bytes and casts on the VPU (no extra HBM pass).
    if compute_dtype is not None:
        w1 = w1.astype(compute_dtype)
        w2 = w2.astype(compute_dtype)

    # One-time wrapper transpose (16 KiB-scale): both in-kernel matmuls become
    # standard row-major contractions and w2's operand is lane-dense.
    w1t = jnp.transpose(w1)   # (c_in, hidden)
    w2t = jnp.transpose(w2)   # (hidden, c_in)

    # Sublane alignment for the row axis: 8 for 32-bit, 16 for 16-bit input dtypes.
    row_align = 16 if jnp.dtype(x.dtype).itemsize == 2 else 8

    # Effective tile: as large as requested, but never (much) larger than the problem.
    bm = min(block_m, _round_up(M, row_align))
    bm = _round_up(bm, row_align)

    # v7x has 2 TensorCores: if M is big enough to be worth splitting but the tile
    # would give a single grid step, halve it so the "parallel" axis feeds both TCs.
    _MIN_ROWS_FOR_SPLIT = 1024
    if M >= _MIN_ROWS_FOR_SPLIT and pl.cdiv(M, bm) < 2:
        bm = _round_up((M + 1) // 2, row_align)

    grid_m = pl.cdiv(M, bm)   # no padding: Pallas masks the partial last block on write

    # Explicit VMEM budget only when the tile approaches the 32 MiB scoped default
    # (v7x physical VMEM is 64 MiB, half of v5e/v6e).
    est = _vmem_estimate_bytes(
        bm, c_in, hidden,
        jnp.dtype(x.dtype).itemsize,
        jnp.dtype(out_dtype).itemsize,
        jnp.dtype(w1t.dtype).itemsize,
    )
    vmem_limit = None
    if est > 28 * (1 << 20):
        vmem_limit = min(int(est * 1.25) + (4 << 20), 60 << 20)

    kernel = functools.partial(_adapter_kernel, compute_dtype=compute_dtype)

    out = pl.pallas_call(
        kernel,
        out_shape=jax.ShapeDtypeStruct((M, c_in), out_dtype),
        grid_spec=pltpu.PrefetchScalarGridSpec(
            num_scalar_prefetch=0,
            grid=(grid_m,),
            in_specs=[
                pl.BlockSpec((bm, c_in), lambda i: (i, 0)),         # x row tile
                pl.BlockSpec((c_in, hidden), lambda i: (0, 0)),     # W1^T resident
                pl.BlockSpec((hidden, c_in), lambda i: (0, 0)),     # W2^T resident
            ],
            out_specs=pl.BlockSpec((bm, c_in), lambda i: (i, 0)),
        ),
        compiler_params=pltpu.CompilerParams(
            dimension_semantics=("parallel",),   # row axis shards across TCs on v7x
            vmem_limit_bytes=vmem_limit,
        ),
    )(x, w1t, w2t)

    return out


def adapter_reference(x, w1, w2, compute_dtype=jnp.bfloat16):
    """Pure-JAX reference mirroring the kernel's precision (bf16 operands, f32 accum)."""
    out_dtype = x.dtype
    if compute_dtype is not None:
        x = x.astype(compute_dtype)
        w1 = w1.astype(compute_dtype)
        w2 = w2.astype(compute_dtype)
    h = jnp.maximum(jnp.dot(x, w1.T, preferred_element_type=jnp.float32), 0.0)
    y = jnp.maximum(jnp.dot(h.astype(w2.dtype), w2.T,
                            preferred_element_type=jnp.float32), 0.0)
    return y.astype(out_dtype)


if __name__ == "__main__":
    key = jax.random.PRNGKey(0)
    k_x, k_w1, k_w2 = jax.random.split(key, 3)

    # Small shapes consistent with the module: c_in=128, reduction=4 -> hidden=32.
    # M=20 is deliberately NOT a multiple of the sublane tile to exercise the
    # ragged / partial-last-block path (no wrapper pad or slice anymore).
    M, c_in, reduction = 20, 128, 4
    hidden = c_in // reduction

    x = jax.random.normal(k_x, (M, c_in), dtype=jnp.float32)
    # Deterministic synthetic init (Kaiming-uniform-like scale), no checkpoint load.
    w1 = jax.random.uniform(k_w1, (hidden, c_in), dtype=jnp.float32,
                            minval=-1.0, maxval=1.0) * (1.0 / (c_in ** 0.5))
    w2 = jax.random.uniform(k_w2, (c_in, hidden), dtype=jnp.float32,
                            minval=-1.0, maxval=1.0) * (1.0 / (hidden ** 0.5))

    # bf16 compute path (default fast path on all generations).
    y = jax.block_until_ready(adapter_forward(x, w1, w2))
    y_ref = adapter_reference(x, w1, w2)
    assert y.shape == (M, c_in)
    assert y.dtype == x.dtype
    assert jnp.allclose(y, y_ref, atol=1e-2, rtol=1e-2), "bf16 path mismatch vs reference"

    # f32 compute path sanity check (exact semantics of the PyTorch module).
    y32 = jax.block_until_ready(adapter_forward(x, w1, w2, compute_dtype=None))
    y32_ref = adapter_reference(x, w1, w2, compute_dtype=None)
    assert jnp.allclose(y32, y32_ref, atol=1e-5, rtol=1e-5), "f32 path mismatch vs reference"

    # Multi-tile + ragged-tail path (grid > 1, partial last block) at a small scale.
    M2 = 52
    x2 = jax.random.normal(jax.random.PRNGKey(1), (M2, c_in), dtype=jnp.float32)
    y2 = jax.block_until_ready(adapter_forward(x2, w1, w2, block_m=16))
    y2_ref = adapter_reference(x2, w1, w2)
    assert y2.shape == (M2, c_in)
    assert jnp.allclose(y2, y2_ref, atol=1e-2, rtol=1e-2), "multi-tile path mismatch"

    print("KERNEL_OK")
</pallas_src>

<mosaic_0001>
module attributes {stable_mosaic.version = 11 : i64} {
  func.func @_adapter_kernel(%arg0: i32, %arg1: memref<24x128xf32, #tpu.memory_space<vmem>>, %arg2: memref<128x32xbf16, #tpu.memory_space<vmem>>, %arg3: memref<32x128xbf16, #tpu.memory_space<vmem>>, %arg4: memref<24x128xf32, #tpu.memory_space<vmem>>) attributes {dimension_semantics = [#tpu.dimension_semantics<parallel>], iteration_bounds = array<i64: 1>, scalar_prefetch = 0 : i64, scratch_operands = 0 : i64, tpu.core_type = #tpu.core_type<tc>, window_params = [{transform_indices = @transform_0, window_bounds = array<i64: 24, 128>}, {pipeline_mode = #tpu.pipeline_mode<synchronous>, transform_indices = @transform_1, window_bounds = array<i64: 128, 32>}, {pipeline_mode = #tpu.pipeline_mode<synchronous>, transform_indices = @transform_2, window_bounds = array<i64: 32, 128>}, {transform_indices = @transform_3, window_bounds = array<i64: 24, 128>}]} {
    %c0 = arith.constant 0 : index
    %c0_0 = arith.constant 0 : index
    %0 = vector.load %arg1[%c0, %c0_0] : memref<24x128xf32, #tpu.memory_space<vmem>>, vector<24x128xf32>
    %1 = arith.truncf %0 : vector<24x128xf32> to vector<24x128xbf16>
    %c0_1 = arith.constant 0 : index
    %c0_2 = arith.constant 0 : index
    %2 = vector.load %arg2[%c0_1, %c0_2] : memref<128x32xbf16, #tpu.memory_space<vmem>>, vector<128x32xbf16>
    %cst = arith.constant dense<0.000000e+00> : vector<24x32xf32>
    %3 = tpu.matmul %1, %2, %cst {dimension_numbers = #tpu.dot_dimension_numbers<[1], [0], [0], [1], [0, 0, 1, 1], [], []>} : vector<24x128xbf16>, vector<128x32xbf16>, vector<24x32xf32> -> vector<24x32xf32>
    %cst_3 = arith.constant 0.000000e+00 : f32
    %4 = vector.broadcast %cst_3 : f32 to vector<24x32xf32>
    %5 = arith.maximumf %3, %4 : vector<24x32xf32>
    %6 = arith.truncf %5 : vector<24x32xf32> to vector<24x32xbf16>
    %c0_4 = arith.constant 0 : index
    %c0_5 = arith.constant 0 : index
    %7 = vector.load %arg3[%c0_4, %c0_5] : memref<32x128xbf16, #tpu.memory_space<vmem>>, vector<32x128xbf16>
    %cst_6 = arith.constant dense<0.000000e+00> : vector<24x128xf32>
    %8 = tpu.matmul %6, %7, %cst_6 {dimension_numbers = #tpu.dot_dimension_numbers<[1], [0], [0], [1], [0, 0, 1, 1], [], []>} : vector<24x32xbf16>, vector<32x128xbf16>, vector<24x128xf32> -> vector<24x128xf32>
    %cst_7 = arith.constant 0.000000e+00 : f32
    %9 = vector.broadcast %cst_7 : f32 to vector<24x128xf32>
    %10 = arith.maximumf %8, %9 : vector<24x128xf32>
    %c0_8 = arith.constant 0 : index
    %c0_9 = arith.constant 0 : index
    %11 = vector.load %arg4[%c0_8, %c0_9] : memref<24x128xf32, #tpu.memory_space<vmem>>, vector<24x128xf32>
    tpu.vector_store %arg4[%c0_8, %c0_9], %10 {strides = array<i32>} : memref<24x128xf32, #tpu.memory_space<vmem>>, vector<24x128xf32>,
    return
  }
  func.func @transform_0(%arg0: i32) -> (i32, i32) {
    %c0_i32 = arith.constant 0 : i32
    %c0_i32_0 = arith.constant 0 : i32
    return %arg0, %c0_i32 : i32, i32
  }
  func.func @transform_1(%arg0: i32) -> (i32, i32) {
    %c0_i32 = arith.constant 0 : i32
    %c0_i32_0 = arith.constant 0 : i32
    %c0_i32_1 = arith.constant 0 : i32
    return %c0_i32, %c0_i32_0 : i32, i32
  }
  func.func @transform_2(%arg0: i32) -> (i32, i32) {
    %c0_i32 = arith.constant 0 : i32
    %c0_i32_0 = arith.constant 0 : i32
    %c0_i32_1 = arith.constant 0 : i32
    return %c0_i32, %c0_i32_0 : i32, i32
  }
  func.func @transform_3(%arg0: i32) -> (i32, i32) {
    %c0_i32 = arith.constant 0 : i32
    %c0_i32_0 = arith.constant 0 : i32
    return %arg0, %c0_i32 : i32, i32
  }
}

</mosaic_0001>

<llo_original>
// kernel: tpu_custom_call.1
$region0: #{tpu_custom_call.1}
  #allocation0 [shape = 'u32[]', space=smem, size = 0x4, offset = 0x4, fixed_abs, tag = 'smem constant byte address 0x4 - core index']
  #allocation1 [shape = 'u32[144,128]{1,0:T(1,128)}', space=vmem, size = 0x12000, scoped, tag = 'internal scratch']
  %s0 = inlined_call_operand.vmem [shape: f32[20,128], index: 0, kind: input, shape index: {}]
  %s1 = inlined_call_operand.vmem [shape: bf16[128,32], index: 1, kind: input, shape index: {}]
  %s2 = inlined_call_operand.vmem [shape: bf16[32,128], index: 2, kind: input, shape index: {}]
  %s3 = inlined_call_operand.hbm [shape: f32[20,128], index: 3, kind: output, shape index: {}]
  %s4 = sld [smem:[#allocation0]]
  $region22: #{tpu_custom_call.1} parent=0
    _
  %s6 = ssub.s32 1, %s4
  %s7 = scalar_select 0, %s6, %s4
  $region1: #{tpu_custom_call.1} parent=0
    #allocation2 [shape = 'u8[12288]{0}', space=vmem, size = 0x3000, scoped, tag = 'output window, operand 0, single buffered']
    #allocation3 [shape = 's32[1]{0}', space=sflag, size = 0x4, scoped, tag = 'scoped memory for tpu_custom_call.1']
    %8 = vsyncpa [#allocation3], 0
    // Predicated region
    $region2: #{tpu_custom_call.1} parent=1 // pred_check
      _
    $region3: #{tpu_custom_call.1} parent=1 // pred_check_branch
      %10 = sbr.rel (0) target = $region5
    $region4: #{tpu_custom_call.1} parent=1 // pred_region
      _
    $region5: #{tpu_custom_call.1} parent=1 // pred_fallthru
      _
    // Predicated region
    $region6: #{tpu_custom_call.1} parent=1 // pred_check
      _
    $region7: #{tpu_custom_call.1} parent=1 // pred_check_branch
      %12 = sbr.rel (0) target = $region9
    $region8: #{tpu_custom_call.1} parent=1 // pred_region
      _
    $region9: #{tpu_custom_call.1} parent=1 // pred_fallthru
      _
    // Predicated region
    $region10: #{tpu_custom_call.1} parent=1 // pred_check
      _
    $region11: #{tpu_custom_call.1} parent=1 // pred_check_branch
      %14 = sbr.rel (0) target = $region13
    $region12: #{tpu_custom_call.1} parent=1 // pred_region
      _
    $region13: #{tpu_custom_call.1} parent=1 // pred_fallthru
      _
    %v16 = vld [vmem:[%s0] sm:$0xff]
    %v17 = vld [vmem:[%s0 + $0x8] sm:$0xff]
    %v18 = vld [vmem:[%s0 + $0x10] sm:$0xff]
    %v19 = vpack.c.bf16 %v17, %v16
    %v20 = vpack.c.bf16 %v18, %v18
    %v21 = vld [vmem:[%s1] sm:$0xf]
    %v22 = vld [vmem:[%s1 + $0x4] sm:$0xf]
    %v23 = vld [vmem:[%s1 + $0x8] sm:$0xf]
    %v24 = vld [vmem:[%s1 + $0xc] sm:$0xf]
    %v25 = vld [vmem:[%s1 + $0x10] sm:$0xf]
    %v26 = vld [vmem:[%s1 + $0x14] sm:$0xf]
    %v27 = vld [vmem:[%s1 + $0x18] sm:$0xf]
    %v28 = vld [vmem:[%s1 + $0x1c] sm:$0xf]
    %v29 = vld [vmem:[%s1 + $0x20] sm:$0xf]
    %v30 = vld [vmem:[%s1 + $0x24] sm:$0xf]
    %v31 = vld [vmem:[%s1 + $0x28] sm:$0xf]
    %v32 = vld [vmem:[%s1 + $0x2c] sm:$0xf]
    %v33 = vld [vmem:[%s1 + $0x30] sm:$0xf]
    %v34 = vld [vmem:[%s1 + $0x34] sm:$0xf]
    %v35 = vld [vmem:[%s1 + $0x38] sm:$0xf]
    %v36 = vld [vmem:[%s1 + $0x3c] sm:$0xf]
    %v53 = vunpack.c.l.b16 %v21
    %v54 = vunpack.c.l.b16 %v22
    %v55 = vunpack.c.l.b16 %v23
    %v56 = vunpack.c.l.b16 %v24
    %v57 = vunpack.c.l.b16 %v25
    %v58 = vunpack.c.l.b16 %v26
    %v59 = vunpack.c.l.b16 %v27
    %v60 = vunpack.c.l.b16 %v28
    %v61 = vunpack.c.l.b16 %v29
    %v62 = vunpack.c.l.b16 %v30
    %v63 = vunpack.c.l.b16 %v31
    %v64 = vunpack.c.l.b16 %v32
    %v65 = vunpack.c.l.b16 %v33
    %v66 = vunpack.c.l.b16 %v34
    %v67 = vunpack.c.l.b16 %v35
    %v68 = vunpack.c.l.b16 %v36
    %v69 = vpack.c.b16 %v54, %v53
    %v70 = vpack.c.b16 %v56, %v55
    %v71 = vpack.c.b16 %v58, %v57
    %v72 = vpack.c.b16 %v60, %v59
    %v73 = vpack.c.b16 %v62, %v61
    %v74 = vpack.c.b16 %v64, %v63
    %v75 = vpack.c.b16 %v66, %v65
    %v76 = vpack.c.b16 %v68, %v67
    %85 = vmatprep.subr.bf16.mxu0 0
    %86 = vmatpush1.bf16.msra.mxu0 %v69
    %87 = vmatprep.subr.bf16.mxu0 0
    %88 = vmatpush1.bf16.msra.mxu0 %v70
    %89 = vmatprep.subr.bf16.mxu0 0
    %90 = vmatpush1.bf16.msra.mxu0 %v71
    %91 = vmatprep.subr.bf16.mxu0 0
    %92 = vmatpush1.bf16.msra.mxu0 %v72
    %93 = vmatprep.subr.bf16.mxu0 0
    %94 = vmatpush1.bf16.msra.mxu0 %v73
    %95 = vmatprep.subr.bf16.mxu0 0
    %96 = vmatpush1.bf16.msra.mxu0 %v74
    %97 = vmatprep.subr.bf16.mxu0 0
    %98 = vmatpush1.bf16.msra.mxu0 %v75
    %99 = vmatprep.subr.bf16.mxu0 0
    %100 = vmatpush1.bf16.msra.mxu0 %v76
    %101 = vmatprep.subr.bf16.mxu0 0
    %102 = vmatpush1.bf16.msra.mxu0 0
    %103 = vmatprep.subr.bf16.mxu0 0
    %104 = vmatpush1.bf16.msra.mxu0 0
    %105 = vmatprep.subr.bf16.mxu0 0
    %106 = vmatpush1.bf16.msra.mxu0 0
    %107 = vmatprep.subr.bf16.mxu0 0
    %108 = vmatpush1.bf16.msra.mxu0 0
    %109 = vmatprep.subr.bf16.mxu0 0
    %110 = vmatpush1.bf16.msra.mxu0 0
    %111 = vmatprep.subr.bf16.mxu0 0
    %112 = vmatpush1.bf16.msra.mxu0 0
    %113 = vmatprep.subr.bf16.mxu0 0
    %114 = vmatpush1.bf16.msra.mxu0 0
    %115 = vmatprep.subr.bf16.mxu0 0
    %116 = vmatpush1.bf16.msra.mxu0 0
    %117 = vmatprep.mubr.bf16.mxu0 0
    %118 = vmatmul.mubr.bf16.gmra.mrb[0].mxu0 %v19
    %v119 = vpop.f32.mrb[0].mxu0
    %v120 = vadd.f32 0.0, %v119
    %v121 = vpop.f32.mrb[0].mxu0
    %v122 = vpop.f32.mrb[0].mxu0
    %v123 = vadd.f32 0.0, %v122
    %v124 = vpop.f32.mrb[0].mxu0
    %125 = vmatprep.mubr.bf16.mxu0 0
    %126 = vmatmul.mubr.bf16.gmra.mrb[0].mxu0 %v20
    %v127 = vpop.f32.mrb[0].mxu0
    %v128 = vadd.f32 0.0, %v127
    %v129 = vpop.f32.mrb[0].mxu0
    %v130 = vpop.f32.mrb[0].mxu0
    %v131 = vpop.f32.mrb[0].mxu0
    %132 = vdwg.mxu0
    %v133 = vmax.f32 %v120, 0.0
    %v134 = vmax.f32 %v123, 0.0
    %v135 = vmax.f32 %v128, 0.0
    %v136 = vpack.c.bf16 %v134, %v133
    %v137 = vpack.c.bf16 %v135, %v135
    %v138 = vld [vmem:[%s2] sm:$0xf]
    %v139 = vld [vmem:[%s2 + $0x4] sm:$0xf]
    %v140 = vld [vmem:[%s2 + $0x8] sm:$0xf]
    %v141 = vld [vmem:[%s2 + $0xc] sm:$0xf]
    %v146 = vunpack.c.l.b16 %v138
    %v147 = vunpack.c.l.b16 %v139
    %v148 = vunpack.c.l.b16 %v140
    %v149 = vunpack.c.l.b16 %v141
    %v150 = vpack.c.b16 %v147, %v146
    %v151 = vpack.c.b16 %v149, %v148
    %vm154 = vcmask 261120
    %v156 = vsel %vm154, %v136, 0
    %v159 = vsel %vm154, %v137, 0
    %161 = vmatprep.subr.bf16.mxu0 0
    %162 = vmatpush1.bf16.msra.mxu0 %v150
    %163 = vmatprep.subr.bf16.mxu0 0
    %164 = vmatpush1.bf16.msra.mxu0 %v151
    %165 = vmatprep.subr.bf16.mxu0 0
    %166 = vmatpush1.bf16.msra.mxu0 0
    %167 = vmatprep.subr.bf16.mxu0 0
    %168 = vmatpush1.bf16.msra.mxu0 0
    %169 = vmatprep.subr.bf16.mxu0 0
    %170 = vmatpush1.bf16.msra.mxu0 0
    %171 = vmatprep.subr.bf16.mxu0 0
    %172 = vmatpush1.bf16.msra.mxu0 0
    %173 = vmatprep.subr.bf16.mxu0 0
    %174 = vmatpush1.bf16.msra.mxu0 0
    %175 = vmatprep.subr.bf16.mxu0 0
    %176 = vmatpush1.bf16.msra.mxu0 0
    %177 = vmatprep.subr.bf16.mxu0 0
    %178 = vmatpush1.bf16.msra.mxu0 0
    %179 = vmatprep.subr.bf16.mxu0 0
    %180 = vmatpush1.bf16.msra.mxu0 0
    %181 = vmatprep.subr.bf16.mxu0 0
    %182 = vmatpush1.bf16.msra.mxu0 0
    %183 = vmatprep.subr.bf16.mxu0 0
    %184 = vmatpush1.bf16.msra.mxu0 0
    %185 = vmatprep.subr.bf16.mxu0 0
    %186 = vmatpush1.bf16.msra.mxu0 0
    %187 = vmatprep.subr.bf16.mxu0 0
    %188 = vmatpush1.bf16.msra.mxu0 0
    %189 = vmatprep.subr.bf16.mxu0 0
    %190 = vmatpush1.bf16.msra.mxu0 0
    %191 = vmatprep.subr.bf16.mxu0 0
    %192 = vmatpush1.bf16.msra.mxu0 0
    %193 = vmatprep.mubr.bf16.mxu0 0
    %194 = vmatmul.mubr.bf16.gmra.mrb[0].mxu0 %v156
    %v195 = vpop.f32.mrb[0].mxu0
    %v196 = vadd.f32 0.0, %v195
    %v197 = vpop.f32.mrb[0].mxu0
    %v198 = vpop.f32.mrb[0].mxu0
    %v199 = vadd.f32 0.0, %v198
    %v200 = vpop.f32.mrb[0].mxu0
    %201 = vmatprep.mubr.bf16.mxu0 0
    %202 = vmatmul.mubr.bf16.gmra.mrb[0].mxu0 %v159
    %v203 = vpop.f32.mrb[0].mxu0
    %v204 = vadd.f32 0.0, %v203
    %v205 = vpop.f32.mrb[0].mxu0
    %v206 = vpop.f32.mrb[0].mxu0
    %v207 = vpop.f32.mrb[0].mxu0
    %208 = vdwg.mxu0
    %v209 = vmax.f32 %v196, 0.0
    %v210 = vmax.f32 %v199, 0.0
    %v211 = vmax.f32 %v204, 0.0
    %212 = vst [vmem:[#allocation2] sm:$0xff] %v209
    %213 = vst [vmem:[#allocation2 + $0x8] sm:$0xff] %v210
    %214 = vst [vmem:[#allocation2 + $0x10] sm:$0xff] %v211
    // Predicated region
    $region14: #{tpu_custom_call.1} parent=1 // pred_check
      _
    $region15: #{tpu_custom_call.1} parent=1 // pred_check_branch
      %216 = sbr.rel (0) target = $region17
    $region16: #{tpu_custom_call.1} parent=1 // pred_region
      %s218 = ssub.s32 384, 384
      %219 = vsyncadd [#allocation3], %s218
      %s220 = sshll.u32 [#allocation2], 4
      %s221 = int_to_ptr.vmem [resolvable:$true] %s220
      %226 = dma.vmem_to_hbm [thread:$0]  %s221, 384, %s3, [#allocation3], 128, 128, 8
    $region17: #{tpu_custom_call.1} parent=1 // pred_fallthru
      _
    // Predicated region
    $region18: #{tpu_custom_call.1} parent=1 // pred_check
      _
    $region19: #{tpu_custom_call.1} parent=1 // pred_check_branch
      %228 = sbr.rel (0) target = $region21
    $region20: #{tpu_custom_call.1} parent=1 // pred_region
      %229 = dma.done [#allocation3], 384
    $region21: #{tpu_custom_call.1} parent=1 // pred_fallthru
      _
    %230 = vsyncpa [#allocation3], 1

</llo_original>
